<compile_context>
chip_gen: v7x
topology: tpu7x:2x2x1
jax: 0.10.0
libtpu: 0.0.40
codegen_flags: <defaults>
</compile_context>

<pallas_src>
import functools

import jax
import jax.numpy as jnp
from jax.experimental import pallas as pl
from jax.experimental.pallas import tpu as pltpu

LANE = 128
SUBLANE = 8


def _round_up(x, m):
    return (x + m - 1) // m * m


def gaussian_fused_kernel(h_ref, w_ref, b_ref, out_ref, *, out_size):
    # Single fused matmul: (TILE_B, H) @ (H, 2O) -> (TILE_B, 2O), f32 accum.
    pre = jnp.dot(h_ref[...], w_ref[...], preferred_element_type=jnp.float32)
    pre = pre + b_ref[...].astype(jnp.float32)

    if out_size % LANE == 0:
        # Production-sized heads: sigma half is vreg-aligned. Apply the EUP
        # softplus only to those lanes; mu lanes are stored untouched.
        mu = pre[:, :out_size]
        sig_pre = pre[:, out_size:]
        sp = (jnp.maximum(sig_pre, 0.0)
              + jnp.log1p(jnp.exp(-jnp.abs(sig_pre))) + 1e-6)
        out_ref[:, :out_size] = mu.astype(out_ref.dtype)
        out_ref[:, out_size:] = sp.astype(out_ref.dtype)
    else:
        # Small O: a lane-slice would need cross-lane movement, so select via
        # a single compare (no padding lanes exist, so `col >= O` suffices).
        sp = (jnp.maximum(pre, 0.0)
              + jnp.log1p(jnp.exp(-jnp.abs(pre))) + 1e-6)
        col = jax.lax.broadcasted_iota(jnp.int32, pre.shape, 1)
        out_ref[...] = jnp.where(col >= out_size, sp, pre).astype(out_ref.dtype)


def fuse_gaussian_params(w_mu, b_mu, w_sigma, b_sigma):
    """One-time parameter plumbing: W_cat = [w_mu | w_sigma], b_cat likewise.

    Call once at parameter-load time (or let it constant-fold under jit);
    do NOT redo it on every forward step.
    """
    O = w_mu.shape[1]
    w_cat = jnp.concatenate([w_mu, w_sigma], axis=1)                 # (H, 2O)
    b_cat = jnp.concatenate([b_mu.reshape(1, O),
                             b_sigma.reshape(1, O)], axis=1)         # (1, 2O)
    return w_cat, b_cat


def gaussian_forward(h, w_cat, b_cat, *, tile_b=1024):
    """h: (B, H); w_cat: (H, 2O); b_cat: (1, 2O).

    Returns (mu, sigma), each (B, O) (leading dim squeezed iff B == 1,
    matching torch's .squeeze(0)).
    """
    B, H = h.shape
    two_o = w_cat.shape[1]
    O = two_o // 2

    # tile_b: multiple of 8 (BlockSpec sublane constraint), capped at the
    # (rounded-up) batch. When B is large enough, also cap at ceil(B/2) so the
    # grid has >= 2 steps and "parallel" shards across v7x's two TensorCores.
    tile_b = min(tile_b, _round_up(B, SUBLANE))
    if B > 64:
        tile_b = min(tile_b, _round_up(-(-B // 2), SUBLANE))
    tile_b = max(SUBLANE, _round_up(tile_b, SUBLANE))

    grid = (pl.cdiv(B, tile_b),)

    out = pl.pallas_call(
        functools.partial(gaussian_fused_kernel, out_size=O),
        out_shape=jax.ShapeDtypeStruct((B, two_o), h.dtype),
        grid_spec=pltpu.PrefetchScalarGridSpec(
            num_scalar_prefetch=0,
            grid=grid,
            in_specs=[
                pl.BlockSpec((tile_b, H), lambda i: (i, 0)),    # h tile (ragged last block OK)
                pl.BlockSpec((H, two_o), lambda i: (0, 0)),     # fused W (VMEM-resident)
                pl.BlockSpec((1, two_o), lambda i: (0, 0)),     # fused bias (VMEM-resident)
            ],
            out_specs=pl.BlockSpec((tile_b, two_o), lambda i: (i, 0)),
        ),
        compiler_params=pltpu.CompilerParams(
            dimension_semantics=("parallel",),
        ),
    )(h, w_cat, b_cat)

    mu = out[:, :O]
    sigma = out[:, O:]

    # torch .squeeze(0): only drops the leading dim if it is 1
    if B == 1:
        mu = mu[0]
        sigma = sigma[0]
    return mu, sigma


if __name__ == "__main__":
    batch, hidden_size, output_size = 8, 32, 16

    key = jax.random.PRNGKey(0)
    k_h, k_wm, k_bm, k_ws, k_bs = jax.random.split(key, 5)

    # Deterministic PyTorch-Linear-style init: U(-1/sqrt(H), 1/sqrt(H))
    bound = 1.0 / jnp.sqrt(jnp.float32(hidden_size))
    h = jax.random.normal(k_h, (batch, hidden_size), dtype=jnp.float32)
    w_mu = jax.random.uniform(k_wm, (hidden_size, output_size),
                              minval=-bound, maxval=bound, dtype=jnp.float32)
    b_mu = jax.random.uniform(k_bm, (1, output_size),
                              minval=-bound, maxval=bound, dtype=jnp.float32)
    w_sigma = jax.random.uniform(k_ws, (hidden_size, output_size),
                                 minval=-bound, maxval=bound, dtype=jnp.float32)
    b_sigma = jax.random.uniform(k_bs, (1, output_size),
                                 minval=-bound, maxval=bound, dtype=jnp.float32)

    # One-time fusion of the two Linear layers (outside the per-step path).
    w_cat, b_cat = fuse_gaussian_params(w_mu, b_mu, w_sigma, b_sigma)
    w_cat, b_cat = jax.block_until_ready((w_cat, b_cat))

    mu_t, sigma_t = gaussian_forward(h, w_cat, b_cat)
    jax.block_until_ready((mu_t, sigma_t))

    # Reference check in plain JAX (stable softplus == log(1+exp(x)))
    mu_ref = h @ w_mu + b_mu
    sigma_ref = jax.nn.softplus(h @ w_sigma + b_sigma) + 1e-6
    assert mu_t.shape == (batch, output_size)
    assert sigma_t.shape == (batch, output_size)
    assert jnp.allclose(mu_t, mu_ref, atol=1e-5, rtol=1e-5)
    assert jnp.allclose(sigma_t, sigma_ref, atol=1e-5, rtol=1e-5)
    assert bool(jnp.all(sigma_t > 0))

    print("KERNEL_OK")
</pallas_src>

<mosaic_0001>
module attributes {stable_mosaic.version = 11 : i64} {
  func.func @gaussian_fused_kernel(%arg0: i32, %arg1: memref<8x32xf32, #tpu.memory_space<vmem>>, %arg2: memref<32x32xf32, #tpu.memory_space<vmem>>, %arg3: memref<1x32xf32, #tpu.memory_space<vmem>>, %arg4: memref<8x32xf32, #tpu.memory_space<vmem>>) attributes {dimension_semantics = [#tpu.dimension_semantics<parallel>], iteration_bounds = array<i64: 1>, scalar_prefetch = 0 : i64, scratch_operands = 0 : i64, tpu.core_type = #tpu.core_type<tc>, window_params = [{transform_indices = @transform_0, window_bounds = array<i64: 8, 32>}, {pipeline_mode = #tpu.pipeline_mode<synchronous>, transform_indices = @transform_1, window_bounds = array<i64: 32, 32>}, {pipeline_mode = #tpu.pipeline_mode<synchronous>, transform_indices = @transform_2, window_bounds = array<i64: 1, 32>}, {transform_indices = @transform_3, window_bounds = array<i64: 8, 32>}]} {
    %c0 = arith.constant 0 : index
    %c0_0 = arith.constant 0 : index
    %0 = vector.load %arg1[%c0, %c0_0] : memref<8x32xf32, #tpu.memory_space<vmem>>, vector<8x32xf32>
    %c0_1 = arith.constant 0 : index
    %c0_2 = arith.constant 0 : index
    %1 = vector.load %arg2[%c0_1, %c0_2] : memref<32x32xf32, #tpu.memory_space<vmem>>, vector<32x32xf32>
    %cst = arith.constant dense<0.000000e+00> : vector<8x32xf32>
    %2 = tpu.matmul %0, %1, %cst {dimension_numbers = #tpu.dot_dimension_numbers<[1], [0], [0], [1], [0, 0, 1, 1], [], []>} : vector<8x32xf32>, vector<32x32xf32>, vector<8x32xf32> -> vector<8x32xf32>
    %c0_3 = arith.constant 0 : index
    %c0_4 = arith.constant 0 : index
    %3 = vector.load %arg3[%c0_3, %c0_4] : memref<1x32xf32, #tpu.memory_space<vmem>>, vector<1x32xf32>
    %4 = vector.broadcast %3 : vector<1x32xf32> to vector<8x32xf32>
    %5 = arith.addf %2, %4 : vector<8x32xf32>
    %cst_5 = arith.constant 0.000000e+00 : f32
    %6 = vector.broadcast %cst_5 : f32 to vector<8x32xf32>
    %7 = arith.maximumf %5, %6 : vector<8x32xf32>
    %8 = math.absf %5 : vector<8x32xf32>
    %cst_6 = arith.constant 0.000000e+00 : f32
    %9 = vector.broadcast %cst_6 : f32 to vector<8x32xf32>
    %10 = arith.subf %9, %8 : vector<8x32xf32>
    %11 = math.exp %10 : vector<8x32xf32>
    %12 = math.log1p %11 : vector<8x32xf32>
    %13 = arith.addf %7, %12 : vector<8x32xf32>
    %cst_7 = arith.constant 9.99999997E-7 : f32
    %14 = vector.broadcast %cst_7 : f32 to vector<8x32xf32>
    %15 = arith.addf %13, %14 : vector<8x32xf32>
    %16 = tpu.iota {dimensions = array<i32: 1>} : vector<8x32xi32>
    %c16_i32 = arith.constant 16 : i32
    %17 = vector.broadcast %c16_i32 : i32 to vector<8x32xi32>
    %18 = arith.cmpi sge, %16, %17 : vector<8x32xi32>
    %19 = arith.select %18, %15, %5 : vector<8x32xi1>, vector<8x32xf32>
    %c0_8 = arith.constant 0 : index
    %c0_9 = arith.constant 0 : index
    %20 = vector.load %arg4[%c0_8, %c0_9] : memref<8x32xf32, #tpu.memory_space<vmem>>, vector<8x32xf32>
    tpu.vector_store %arg4[%c0_8, %c0_9], %19 {strides = array<i32>} : memref<8x32xf32, #tpu.memory_space<vmem>>, vector<8x32xf32>,
    return
  }
  func.func @transform_0(%arg0: i32) -> (i32, i32) {
    %c0_i32 = arith.constant 0 : i32
    %c0_i32_0 = arith.constant 0 : i32
    return %arg0, %c0_i32 : i32, i32
  }
  func.func @transform_1(%arg0: i32) -> (i32, i32) {
    %c0_i32 = arith.constant 0 : i32
    %c0_i32_0 = arith.constant 0 : i32
    %c0_i32_1 = arith.constant 0 : i32
    return %c0_i32, %c0_i32_0 : i32, i32
  }
  func.func @transform_2(%arg0: i32) -> (i32, i32) {
    %c0_i32 = arith.constant 0 : i32
    %c0_i32_0 = arith.constant 0 : i32
    %c0_i32_1 = arith.constant 0 : i32
    return %c0_i32, %c0_i32_0 : i32, i32
  }
  func.func @transform_3(%arg0: i32) -> (i32, i32) {
    %c0_i32 = arith.constant 0 : i32
    %c0_i32_0 = arith.constant 0 : i32
    return %arg0, %c0_i32 : i32, i32
  }
}

</mosaic_0001>

<llo_original>
// kernel: tpu_custom_call.1
$region0: #{tpu_custom_call.1}
  #allocation0 [shape = 'u32[]', space=smem, size = 0x4, offset = 0x4, fixed_abs, tag = 'smem constant byte address 0x4 - core index']
  #allocation1 [shape = 'u32[144,128]{1,0:T(1,128)}', space=vmem, size = 0x12000, scoped, tag = 'internal scratch']
  %s0 = inlined_call_operand.hbm [shape: f32[8,32], index: 0, kind: input, shape index: {}]
  %s1 = inlined_call_operand.hbm [shape: f32[32,32], index: 1, kind: input, shape index: {}]
  %s2 = inlined_call_operand.vmem [shape: f32[1,32], index: 2, kind: input, shape index: {}]
  %s3 = inlined_call_operand.hbm [shape: f32[8,32], index: 3, kind: output, shape index: {}]
  %s4 = sld [smem:[#allocation0]]
  $region30: #{tpu_custom_call.1} parent=0
    _
  %s6 = ssub.s32 1, %s4
  %s7 = scalar_select 0, %s6, %s4
  $region1: #{tpu_custom_call.1} parent=0
    #allocation2 [shape = 'u8[4096]{0}', space=vmem, size = 0x1000, scoped, tag = 'input window, operand 0, single buffered']
    #allocation3 [shape = 's32[1]{0}', space=sflag, size = 0x4, scoped, tag = 'scoped memory for tpu_custom_call.1']
    #allocation4 [shape = 's32[1]{0}', space=sflag, size = 0x4, scoped, tag = 'scoped memory for tpu_custom_call.1']
    #allocation5 [shape = 'u8[16384]{0}', space=vmem, size = 0x4000, scoped, tag = 'input window, operand 1, single buffered']
    #allocation6 [shape = 's32[1]{0}', space=sflag, size = 0x4, scoped, tag = 'scoped memory for tpu_custom_call.1']
    #allocation7 [shape = 'u8[4096]{0}', space=vmem, size = 0x1000, scoped, tag = 'output window, operand 0, single buffered']
    %8 = vsyncpa [#allocation3], 0
    %9 = vsyncpa [#allocation6], 0
    %10 = vsyncpa [#allocation4], 0
    // Predicated region
    $region2: #{tpu_custom_call.1} parent=1 // pred_check
      _
    $region3: #{tpu_custom_call.1} parent=1 // pred_check_branch
      %12 = sbr.rel (0) target = $region5
    $region4: #{tpu_custom_call.1} parent=1 // pred_region
      %s14 = ssub.s32 128, 128
      %15 = vsyncadd [#allocation3], %s14
      %s17 = sshll.u32 [#allocation2], 4
      %s18 = int_to_ptr.vmem [resolvable:$true] %s17
      %20 = dma.hbm_to_vmem [thread:$0]  %s0, 128, %s18, [#allocation3]
    $region5: #{tpu_custom_call.1} parent=1 // pred_fallthru
      _
    // Predicated region
    $region6: #{tpu_custom_call.1} parent=1 // pred_check
      _
    $region7: #{tpu_custom_call.1} parent=1 // pred_check_branch
      %22 = sbr.rel (0) target = $region9
    $region8: #{tpu_custom_call.1} parent=1 // pred_region
      %s24 = ssub.s32 512, 512
      %25 = vsyncadd [#allocation6], %s24
      %s26 = sshll.u32 [#allocation5], 4
      %s27 = int_to_ptr.vmem [resolvable:$true] %s26
      %32 = dma.hbm_to_vmem [thread:$0]  %s1, 512, %s27, [#allocation6], 128, 128, 8
    $region9: #{tpu_custom_call.1} parent=1 // pred_fallthru
      _
    // Predicated region
    $region10: #{tpu_custom_call.1} parent=1 // pred_check
      _
    $region11: #{tpu_custom_call.1} parent=1 // pred_check_branch
      %34 = sbr.rel (0) target = $region13
    $region12: #{tpu_custom_call.1} parent=1 // pred_region
      _
    $region13: #{tpu_custom_call.1} parent=1 // pred_fallthru
      _
    // Predicated region
    $region14: #{tpu_custom_call.1} parent=1 // pred_check
      _
    $region15: #{tpu_custom_call.1} parent=1 // pred_check_branch
      %36 = sbr.rel (0) target = $region17
    $region16: #{tpu_custom_call.1} parent=1 // pred_region
      %37 = dma.done [#allocation3], 128
    $region17: #{tpu_custom_call.1} parent=1 // pred_fallthru
      _
    // Predicated region
    $region18: #{tpu_custom_call.1} parent=1 // pred_check
      _
    $region19: #{tpu_custom_call.1} parent=1 // pred_check_branch
      %39 = sbr.rel (0) target = $region21
    $region20: #{tpu_custom_call.1} parent=1 // pred_region
      %40 = dma.done [#allocation6], 512
    $region21: #{tpu_custom_call.1} parent=1 // pred_fallthru
      _
    %v41 = vld [vmem:[#allocation2] sm:$0xff]
    %v42 = vld [vmem:[#allocation5] sm:$0xff]
    %v43 = vld [vmem:[#allocation5 + $0x8] sm:$0xff]
    %v44 = vld [vmem:[#allocation5 + $0x10] sm:$0xff]
    %v45 = vld [vmem:[#allocation5 + $0x18] sm:$0xff]
    %v46 = vld [vmem:[%s2] sm:$0x1]
    %v48 = vlaneseq
    %v49 = vshrl.u32 %v48, 7
    %v50 = vsub.s32 0, %v49
    %v51 = vrot.slane %v46, %v50
    %vm53 = vcmask 261120
    %v55 = vsel %vm53, %v41, 0
    %57 = vmatprep.subr.mxu0 0.0
    %58 = vmatpush1.msra.mxu0 %v42
    %59 = vmatprep.subr.mxu0 0.0
    %60 = vmatpush1.msra.mxu0 %v43
    %61 = vmatprep.subr.mxu0 0.0
    %62 = vmatpush1.msra.mxu0 %v44
    %63 = vmatprep.subr.mxu0 0.0
    %64 = vmatpush1.msra.mxu0 %v45
    %65 = vmatprep.subr.mxu0 0.0
    %66 = vmatpush1.msra.mxu0 0.0
    %67 = vmatprep.subr.mxu0 0.0
    %68 = vmatpush1.msra.mxu0 0.0
    %69 = vmatprep.subr.mxu0 0.0
    %70 = vmatpush1.msra.mxu0 0.0
    %71 = vmatprep.subr.mxu0 0.0
    %72 = vmatpush1.msra.mxu0 0.0
    %73 = vmatprep.subr.mxu0 0.0
    %74 = vmatpush1.msra.mxu0 0.0
    %75 = vmatprep.subr.mxu0 0.0
    %76 = vmatpush1.msra.mxu0 0.0
    %77 = vmatprep.subr.mxu0 0.0
    %78 = vmatpush1.msra.mxu0 0.0
    %79 = vmatprep.subr.mxu0 0.0
    %80 = vmatpush1.msra.mxu0 0.0
    %81 = vmatprep.subr.mxu0 0.0
    %82 = vmatpush1.msra.mxu0 0.0
    %83 = vmatprep.subr.mxu0 0.0
    %84 = vmatpush1.msra.mxu0 0.0
    %85 = vmatprep.subr.mxu0 0.0
    %86 = vmatpush1.msra.mxu0 0.0
    %87 = vmatprep.subr.mxu0 0.0
    %88 = vmatpush1.msra.mxu0 0.0
    %89 = vmatprep.subr.mxu0 0.0
    %90 = vmatpush1.msra.mxu0 0.0
    %91 = vmatprep.subr.mxu0 0.0
    %92 = vmatpush1.msra.mxu0 0.0
    %93 = vmatprep.subr.mxu0 0.0
    %94 = vmatpush1.msra.mxu0 0.0
    %95 = vmatprep.subr.mxu0 0.0
    %96 = vmatpush1.msra.mxu0 0.0
    %97 = vmatprep.subr.mxu0 0.0
    %98 = vmatpush1.msra.mxu0 0.0
    %99 = vmatprep.subr.mxu0 0.0
    %100 = vmatpush1.msra.mxu0 0.0
    %101 = vmatprep.subr.mxu0 0.0
    %102 = vmatpush1.msra.mxu0 0.0
    %103 = vmatprep.subr.mxu0 0.0
    %104 = vmatpush1.msra.mxu0 0.0
    %105 = vmatprep.subr.mxu0 0.0
    %106 = vmatpush1.msra.mxu0 0.0
    %107 = vmatprep.subr.mxu0 0.0
    %108 = vmatpush1.msra.mxu0 0.0
    %109 = vmatprep.subr.mxu0 0.0
    %110 = vmatpush1.msra.mxu0 0.0
    %111 = vmatprep.subr.mxu0 0.0
    %112 = vmatpush1.msra.mxu0 0.0
    %113 = vmatprep.subr.mxu0 0.0
    %114 = vmatpush1.msra.mxu0 0.0
    %115 = vmatprep.subr.mxu0 0.0
    %116 = vmatpush1.msra.mxu0 0.0
    %117 = vmatprep.subr.mxu0 0.0
    %118 = vmatpush1.msra.mxu0 0.0
    %119 = vmatprep.subr.mxu0 0.0
    %120 = vmatpush1.msra.mxu0 0.0
    %121 = vmatprep.mubr.f32.mxu0 0.0
    %122 = vmatmul.mubr.f32.gmra.mrb[0].mxu0 %v55
    %v123 = vpop.f32.mrb[0].mxu0
    %v124 = vadd.f32 %v51, %v123
    %v125 = vpop.f32.mrb[0].mxu0
    %126 = vdwg.mxu0
    %v127 = vmax.f32 %v124, 0.0
    %v128 = vand.u32 2147483647, %v124
    %v129 = vsub.f32 0.0, %v128
    %v130 = vmul.f32 %v129, 1.442695
    %v131 = vpow.pop %v130
    %v132 = vadd.f32 %v131, 1.0
    %v133 = vlog2.pop %v132
    %v134 = vmul.f32 %v133, 0.6931472
    %v135 = vmul.f32 -0.5, %v131
    %v136 = vadd.f32 %v135, 1.0
    %v137 = vmul.f32 %v136, %v131
    %v138 = vand.u32 2147483647, %v131
    %vm139 = vcmp.lt.f32.partialorder %v138, 0.0004427343
    %v140 = vsel %vm139, %v137, %v134
    %v141 = vadd.f32 %v127, %v140
    %v142 = vadd.f32 %v141, 1e-06
    %v143 = vlaneseq
    %v144 = vand.u32 %v143, 127
    %vm145 = vcmp.ge.s32.totalorder %v144, 16
    %v146 = vsel %vm145, %v142, %v124
    %147 = vst.msk [vmem:[#allocation7] sm:$0xff] %vm53, %v146
    // Predicated region
    $region22: #{tpu_custom_call.1} parent=1 // pred_check
      _
    $region23: #{tpu_custom_call.1} parent=1 // pred_check_branch
      %149 = sbr.rel (0) target = $region25
    $region24: #{tpu_custom_call.1} parent=1 // pred_region
      %s151 = ssub.s32 128, 128
      %152 = vsyncadd [#allocation4], %s151
      %s154 = sshll.u32 [#allocation7], 4
      %s155 = int_to_ptr.vmem [resolvable:$true] %s154
      %157 = dma.vmem_to_hbm [thread:$0]  %s155, 128, %s3, [#allocation4]
    $region25: #{tpu_custom_call.1} parent=1 // pred_fallthru
      _
    // Predicated region
    $region26: #{tpu_custom_call.1} parent=1 // pred_check
      _
    $region27: #{tpu_custom_call.1} parent=1 // pred_check_branch
      %159 = sbr.rel (0) target = $region29
    $region28: #{tpu_custom_call.1} parent=1 // pred_region
      %160 = dma.done [#allocation4], 128
    $region29: #{tpu_custom_call.1} parent=1 // pred_fallthru
      _
    %161 = vsyncpa [#allocation3], 1
    %162 = vsyncpa [#allocation6], 1
    %163 = vsyncpa [#allocation4], 1

</llo_original>
